<compile_context>
chip_gen: v5e
topology: v5e:2x2
jax: 0.10.0
libtpu: 0.0.40
codegen_flags: <defaults>
</compile_context>

<pallas_src>
from functools import partial

import jax
import jax.numpy as jnp
from jax.experimental import pallas as pl
from jax.experimental.pallas import tpu as pltpu

SUBLANE = 8  # TPU sublane width (second-to-last dim granularity)


def _round_up(x, m):
    return (x + m - 1) // m * m


def policy_net_kernel(x_ref, w1_ref, b1_ref, w2_ref, b2_ref, out_ref):
    # fc1: (tb, in_sz) @ (in_sz, nh) + (1, nh) -> ReLU   (f32 accumulation)
    h = jnp.dot(x_ref[...], w1_ref[...], preferred_element_type=jnp.float32)
    h = jnp.maximum(h + b1_ref[...], 0.0)
    # fc_out: (tb, nh) @ (nh, out_sz) + (1, out_sz)
    logit = jnp.dot(h, w2_ref[...], preferred_element_type=jnp.float32)
    out_ref[...] = (logit + b2_ref[...]).astype(out_ref.dtype)


@partial(jax.jit, static_argnames=("batch_tile",))
def policy_network_forward(x, w1_t, b1, w2_t, b2, *, batch_tile=512):
    """x: (B, in_sz); w1_t: (in_sz, nh); b1: (nh,); w2_t: (nh, out_sz); b2: (out_sz,).

    Returns logits of shape (B, out_sz), identical to
    F.linear(relu(F.linear(x, w1, b1)), w2, b2).
    """
    B, in_sz = x.shape
    nh = w1_t.shape[1]
    out_sz = w2_t.shape[1]

    f32 = jnp.float32
    x = x.astype(f32)
    w1_t = w1_t.astype(f32)
    w2_t = w2_t.astype(f32)
    b1_2d = b1.reshape(1, nh).astype(f32)
    b2_2d = b2.reshape(1, out_sz).astype(f32)

    # Batch tiling: a single full-extent tile when B <= batch_tile (cheapest on
    # single-TC v5e/v6e); otherwise 8-row-aligned tiles and a cdiv grid whose
    # "parallel" axis shards across both TensorCores on v7x.
    if B <= batch_tile:
        tb = B
    else:
        tb = _round_up(batch_tile, SUBLANE)
    n_tiles = pl.cdiv(B, tb)

    flops = 2 * B * (in_sz * nh + nh * out_sz)
    bytes_accessed = 4 * (x.size + w1_t.size + b1.size + w2_t.size + b2.size
                          + B * out_sz)

    return pl.pallas_call(
        policy_net_kernel,
        out_shape=jax.ShapeDtypeStruct((B, out_sz), x.dtype),
        grid=(n_tiles,),
        in_specs=[
            # x: streams one batch tile per grid step (feature dim full-extent).
            pl.BlockSpec((tb, in_sz), lambda i: (i, 0)),
            # weights / biases: same block every step -> VMEM-resident, DMA'd once.
            pl.BlockSpec((in_sz, nh), lambda i: (0, 0)),
            pl.BlockSpec((1, nh), lambda i: (0, 0)),
            pl.BlockSpec((nh, out_sz), lambda i: (0, 0)),
            pl.BlockSpec((1, out_sz), lambda i: (0, 0)),
        ],
        out_specs=pl.BlockSpec((tb, out_sz), lambda i: (i, 0)),
        compiler_params=pltpu.CompilerParams(
            dimension_semantics=("parallel",)),  # 2 TCs on v7x; neutral on v5e/v6e
        cost_estimate=pl.CostEstimate(
            flops=flops, transcendentals=0, bytes_accessed=bytes_accessed),
    )(x, w1_t, b1_2d, w2_t, b2_2d)


if __name__ == "__main__":
    # Shapes implied by the module: fc1: in_sz -> nh, fc_out: nh -> out_sz.
    in_sz, nh, out_sz = 32, 64, 8

    key = jax.random.PRNGKey(0)
    kx, kw1, kb1, kw2, kb2 = jax.random.split(key, 5)

    # Deterministic synthetic params, PyTorch layout (out_features, in_features).
    bound1 = 1.0 / jnp.sqrt(in_sz)
    w1 = jax.random.uniform(kw1, (nh, in_sz), minval=-bound1, maxval=bound1,
                            dtype=jnp.float32)
    b1 = jax.random.uniform(kb1, (nh,), minval=-bound1, maxval=bound1,
                            dtype=jnp.float32)
    bound2 = 1.0 / jnp.sqrt(nh)
    w2 = jax.random.uniform(kw2, (out_sz, nh), minval=-bound2, maxval=bound2,
                            dtype=jnp.float32)
    b2 = jax.random.uniform(kb2, (out_sz,), minval=-bound2, maxval=bound2,
                            dtype=jnp.float32)

    def ref_forward(xv):
        # Pure-JAX reference with identical semantics to the PyTorch forward.
        return jnp.maximum(xv @ w1.T + b1, 0.0) @ w2.T + b2

    # Case 1: B <= batch_tile -> single full-extent tile, grid=(1,).
    B1 = 256
    x1 = jax.random.normal(kx, (B1, in_sz), dtype=jnp.float32)
    out1 = jax.block_until_ready(policy_network_forward(x1, w1.T, b1, w2.T, b2))
    assert out1.shape == (B1, out_sz)
    assert jnp.allclose(out1, ref_forward(x1), atol=1e-5, rtol=1e-5), \
        "mismatch vs reference (single-tile case)"

    # Case 2: ragged multi-tile grid (exercises batch tiling + masked last block).
    B2 = 300
    x2 = jax.random.normal(jax.random.fold_in(kx, 1), (B2, in_sz),
                           dtype=jnp.float32)
    out2 = jax.block_until_ready(
        policy_network_forward(x2, w1.T, b1, w2.T, b2, batch_tile=128))
    assert out2.shape == (B2, out_sz)
    assert jnp.allclose(out2, ref_forward(x2), atol=1e-5, rtol=1e-5), \
        "mismatch vs reference (ragged multi-tile case)"

    print("KERNEL_OK")
</pallas_src>

<mosaic_0001>
module attributes {stable_mosaic.version = 11 : i64} {
  func.func @policy_net_kernel(%arg0: i32, %arg1: memref<256x32xf32, #tpu.memory_space<vmem>>, %arg2: memref<32x64xf32, #tpu.memory_space<vmem>>, %arg3: memref<1x64xf32, #tpu.memory_space<vmem>>, %arg4: memref<64x8xf32, #tpu.memory_space<vmem>>, %arg5: memref<1x8xf32, #tpu.memory_space<vmem>>, %arg6: memref<256x8xf32, #tpu.memory_space<vmem>>) attributes {dimension_semantics = [#tpu.dimension_semantics<parallel>], iteration_bounds = array<i64: 1>, scalar_prefetch = 0 : i64, scratch_operands = 0 : i64, tpu.core_type = #tpu.core_type<tc>, window_params = [{transform_indices = @transform_0, window_bounds = array<i64: 256, 32>}, {pipeline_mode = #tpu.pipeline_mode<synchronous>, transform_indices = @transform_1, window_bounds = array<i64: 32, 64>}, {pipeline_mode = #tpu.pipeline_mode<synchronous>, transform_indices = @transform_2, window_bounds = array<i64: 1, 64>}, {pipeline_mode = #tpu.pipeline_mode<synchronous>, transform_indices = @transform_3, window_bounds = array<i64: 64, 8>}, {pipeline_mode = #tpu.pipeline_mode<synchronous>, transform_indices = @transform_4, window_bounds = array<i64: 1, 8>}, {transform_indices = @transform_5, window_bounds = array<i64: 256, 8>}]} {
    %c0 = arith.constant 0 : index
    %c0_0 = arith.constant 0 : index
    %0 = vector.load %arg1[%c0, %c0_0] : memref<256x32xf32, #tpu.memory_space<vmem>>, vector<256x32xf32>
    %c0_1 = arith.constant 0 : index
    %c0_2 = arith.constant 0 : index
    %1 = vector.load %arg2[%c0_1, %c0_2] : memref<32x64xf32, #tpu.memory_space<vmem>>, vector<32x64xf32>
    %cst = arith.constant dense<0.000000e+00> : vector<256x64xf32>
    %2 = tpu.matmul %0, %1, %cst {dimension_numbers = #tpu.dot_dimension_numbers<[1], [0], [0], [1], [0, 0, 1, 1], [], []>} : vector<256x32xf32>, vector<32x64xf32>, vector<256x64xf32> -> vector<256x64xf32>
    %c0_3 = arith.constant 0 : index
    %c0_4 = arith.constant 0 : index
    %3 = vector.load %arg3[%c0_3, %c0_4] : memref<1x64xf32, #tpu.memory_space<vmem>>, vector<1x64xf32>
    %4 = vector.broadcast %3 : vector<1x64xf32> to vector<256x64xf32>
    %5 = arith.addf %2, %4 : vector<256x64xf32>
    %cst_5 = arith.constant 0.000000e+00 : f32
    %6 = vector.broadcast %cst_5 : f32 to vector<256x64xf32>
    %7 = arith.maximumf %5, %6 : vector<256x64xf32>
    %c0_6 = arith.constant 0 : index
    %c0_7 = arith.constant 0 : index
    %8 = vector.load %arg4[%c0_6, %c0_7] : memref<64x8xf32, #tpu.memory_space<vmem>>, vector<64x8xf32>
    %cst_8 = arith.constant dense<0.000000e+00> : vector<256x8xf32>
    %9 = tpu.matmul %7, %8, %cst_8 {dimension_numbers = #tpu.dot_dimension_numbers<[1], [0], [0], [1], [0, 0, 1, 1], [], []>} : vector<256x64xf32>, vector<64x8xf32>, vector<256x8xf32> -> vector<256x8xf32>
    %c0_9 = arith.constant 0 : index
    %c0_10 = arith.constant 0 : index
    %10 = vector.load %arg5[%c0_9, %c0_10] : memref<1x8xf32, #tpu.memory_space<vmem>>, vector<1x8xf32>
    %11 = vector.broadcast %10 : vector<1x8xf32> to vector<256x8xf32>
    %12 = arith.addf %9, %11 : vector<256x8xf32>
    %c0_11 = arith.constant 0 : index
    %c0_12 = arith.constant 0 : index
    %13 = vector.load %arg6[%c0_11, %c0_12] : memref<256x8xf32, #tpu.memory_space<vmem>>, vector<256x8xf32>
    tpu.vector_store %arg6[%c0_11, %c0_12], %12 {strides = array<i32>} : memref<256x8xf32, #tpu.memory_space<vmem>>, vector<256x8xf32>,
    return
  }
  func.func @transform_0(%arg0: i32) -> (i32, i32) {
    %c0_i32 = arith.constant 0 : i32
    %c0_i32_0 = arith.constant 0 : i32
    return %arg0, %c0_i32 : i32, i32
  }
  func.func @transform_1(%arg0: i32) -> (i32, i32) {
    %c0_i32 = arith.constant 0 : i32
    %c0_i32_0 = arith.constant 0 : i32
    %c0_i32_1 = arith.constant 0 : i32
    return %c0_i32, %c0_i32_0 : i32, i32
  }
  func.func @transform_2(%arg0: i32) -> (i32, i32) {
    %c0_i32 = arith.constant 0 : i32
    %c0_i32_0 = arith.constant 0 : i32
    %c0_i32_1 = arith.constant 0 : i32
    return %c0_i32, %c0_i32_0 : i32, i32
  }
  func.func @transform_3(%arg0: i32) -> (i32, i32) {
    %c0_i32 = arith.constant 0 : i32
    %c0_i32_0 = arith.constant 0 : i32
    %c0_i32_1 = arith.constant 0 : i32
    return %c0_i32, %c0_i32_0 : i32, i32
  }
  func.func @transform_4(%arg0: i32) -> (i32, i32) {
    %c0_i32 = arith.constant 0 : i32
    %c0_i32_0 = arith.constant 0 : i32
    %c0_i32_1 = arith.constant 0 : i32
    return %c0_i32, %c0_i32_0 : i32, i32
  }
  func.func @transform_5(%arg0: i32) -> (i32, i32) {
    %c0_i32 = arith.constant 0 : i32
    %c0_i32_0 = arith.constant 0 : i32
    return %arg0, %c0_i32 : i32, i32
  }
}

</mosaic_0001>

<llo_original>
// kernel: policy_network_forward.1
$region0: #{policy_network_forward.1}
  #allocation0 [shape = 'u32[]', space=smem, size = 0x4, offset = 0x4, fixed_abs, tag = 'smem constant byte address 0x4 - core index']
  #allocation1 [shape = 'u32[72,128]{1,0:T(1,128)}', space=vmem, size = 0x9000, scoped, tag = 'internal scratch']
  %s0 = inlined_call_operand.vmem [shape: f32[256,32], index: 0, kind: input, shape index: {}]
  %s1 = inlined_call_operand.vmem [shape: f32[32,64], index: 1, kind: input, shape index: {}]
  %s2 = inlined_call_operand.vmem [shape: f32[1,64], index: 2, kind: input, shape index: {}]
  %s3 = inlined_call_operand.vmem [shape: f32[64,8], index: 3, kind: input, shape index: {}]
  %s4 = inlined_call_operand.vmem [shape: f32[1,8], index: 4, kind: input, shape index: {}]
  %s5 = inlined_call_operand.vmem [shape: f32[256,8], index: 5, kind: output, shape index: {}]
  %s6 = sld [smem:[#allocation0]]
  $region30: #{policy_network_forward.1} parent=0
    _
  %s8 = ssub.s32 1, %s6
  %s9 = scalar_select 0, %s8, %s6
  // Predicated region
  $region2: #{policy_network_forward.1} parent=0 // pred_check
    _
  $region3: #{policy_network_forward.1} parent=0 // pred_check_branch
    %11 = sbr.rel (0) target = $region5
  $region4: #{policy_network_forward.1} parent=0 // pred_region
    _
  $region5: #{policy_network_forward.1} parent=0 // pred_fallthru
    _
  // Predicated region
  $region6: #{policy_network_forward.1} parent=0 // pred_check
    _
  $region7: #{policy_network_forward.1} parent=0 // pred_check_branch
    %13 = sbr.rel (0) target = $region9
  $region8: #{policy_network_forward.1} parent=0 // pred_region
    _
  $region9: #{policy_network_forward.1} parent=0 // pred_fallthru
    _
  // Predicated region
  $region10: #{policy_network_forward.1} parent=0 // pred_check
    _
  $region11: #{policy_network_forward.1} parent=0 // pred_check_branch
    %15 = sbr.rel (0) target = $region13
  $region12: #{policy_network_forward.1} parent=0 // pred_region
    _
  $region13: #{policy_network_forward.1} parent=0 // pred_fallthru
    _
  // Predicated region
  $region14: #{policy_network_forward.1} parent=0 // pred_check
    _
  $region15: #{policy_network_forward.1} parent=0 // pred_check_branch
    %17 = sbr.rel (0) target = $region17
  $region16: #{policy_network_forward.1} parent=0 // pred_region
    _
  $region17: #{policy_network_forward.1} parent=0 // pred_fallthru
    _
  // Predicated region
  $region18: #{policy_network_forward.1} parent=0 // pred_check
    _
  $region19: #{policy_network_forward.1} parent=0 // pred_check_branch
    %19 = sbr.rel (0) target = $region21
  $region20: #{policy_network_forward.1} parent=0 // pred_region
    _
  $region21: #{policy_network_forward.1} parent=0 // pred_fallthru
    _
  %v20 = vld [vmem:[%s0] sm:$0xff]
  %v21 = vld [vmem:[%s0 + $0x8] sm:$0xff]
  %v22 = vld [vmem:[%s0 + $0x10] sm:$0xff]
  %v23 = vld [vmem:[%s0 + $0x18] sm:$0xff]
  %v24 = vld [vmem:[%s0 + $0x20] sm:$0xff]
  %v25 = vld [vmem:[%s0 + $0x28] sm:$0xff]
  %v26 = vld [vmem:[%s0 + $0x30] sm:$0xff]
  %v27 = vld [vmem:[%s0 + $0x38] sm:$0xff]
  %v28 = vld [vmem:[%s0 + $0x40] sm:$0xff]
  %v29 = vld [vmem:[%s0 + $0x48] sm:$0xff]
  %v30 = vld [vmem:[%s0 + $0x50] sm:$0xff]
  %v31 = vld [vmem:[%s0 + $0x58] sm:$0xff]
  %v32 = vld [vmem:[%s0 + $0x60] sm:$0xff]
  %v33 = vld [vmem:[%s0 + $0x68] sm:$0xff]
  %v34 = vld [vmem:[%s0 + $0x70] sm:$0xff]
  %v35 = vld [vmem:[%s0 + $0x78] sm:$0xff]
  %v36 = vld [vmem:[%s0 + $0x80] sm:$0xff]
  %v37 = vld [vmem:[%s0 + $0x88] sm:$0xff]
  %v38 = vld [vmem:[%s0 + $0x90] sm:$0xff]
  %v39 = vld [vmem:[%s0 + $0x98] sm:$0xff]
  %v40 = vld [vmem:[%s0 + $0xa0] sm:$0xff]
  %v41 = vld [vmem:[%s0 + $0xa8] sm:$0xff]
  %v42 = vld [vmem:[%s0 + $0xb0] sm:$0xff]
  %v43 = vld [vmem:[%s0 + $0xb8] sm:$0xff]
  %v44 = vld [vmem:[%s0 + $0xc0] sm:$0xff]
  %v45 = vld [vmem:[%s0 + $0xc8] sm:$0xff]
  %v46 = vld [vmem:[%s0 + $0xd0] sm:$0xff]
  %v47 = vld [vmem:[%s0 + $0xd8] sm:$0xff]
  %v48 = vld [vmem:[%s0 + $0xe0] sm:$0xff]
  %v49 = vld [vmem:[%s0 + $0xe8] sm:$0xff]
  %v50 = vld [vmem:[%s0 + $0xf0] sm:$0xff]
  %v51 = vld [vmem:[%s0 + $0xf8] sm:$0xff]
  %v52 = vld [vmem:[%s1] sm:$0xff]
  %v53 = vld [vmem:[%s1 + $0x8] sm:$0xff]
  %v54 = vld [vmem:[%s1 + $0x10] sm:$0xff]
  %v55 = vld [vmem:[%s1 + $0x18] sm:$0xff]
  %v56 = vld [vmem:[%s2] sm:$0x1]
  %v58 = vperm.slane %v56, 0
  %vm60 = vcmask 261120
  %v62 = vsel %vm60, %v20, 0
  %v65 = vsel %vm60, %v21, 0
  %v68 = vsel %vm60, %v22, 0
  %v71 = vsel %vm60, %v23, 0
  %v74 = vsel %vm60, %v24, 0
  %v77 = vsel %vm60, %v25, 0
  %v80 = vsel %vm60, %v26, 0
  %v83 = vsel %vm60, %v27, 0
  %v86 = vsel %vm60, %v28, 0
  %v89 = vsel %vm60, %v29, 0
  %v92 = vsel %vm60, %v30, 0
  %v95 = vsel %vm60, %v31, 0
  %v98 = vsel %vm60, %v32, 0
  %v101 = vsel %vm60, %v33, 0
  %v104 = vsel %vm60, %v34, 0
  %v107 = vsel %vm60, %v35, 0
  %v110 = vsel %vm60, %v36, 0
  %v113 = vsel %vm60, %v37, 0
  %v116 = vsel %vm60, %v38, 0
  %v119 = vsel %vm60, %v39, 0
  %v122 = vsel %vm60, %v40, 0
  %v125 = vsel %vm60, %v41, 0
  %v128 = vsel %vm60, %v42, 0
  %v131 = vsel %vm60, %v43, 0
  %v134 = vsel %vm60, %v44, 0
  %v137 = vsel %vm60, %v45, 0
  %v140 = vsel %vm60, %v46, 0
  %v143 = vsel %vm60, %v47, 0
  %v146 = vsel %vm60, %v48, 0
  %v149 = vsel %vm60, %v49, 0
  %v152 = vsel %vm60, %v50, 0
  %v155 = vsel %vm60, %v51, 0
  %157 = vmatpush.msra.mxu0 0.0
  %158 = vmatpush.msra.mxu0 0.0
  %159 = vmatpush.msra.mxu0 0.0
  %160 = vmatpush.msra.mxu0 0.0
  %161 = vmatpush.msra.mxu0 0.0
  %162 = vmatpush.msra.mxu0 0.0
  %163 = vmatpush.msra.mxu0 0.0
  %164 = vmatpush.msra.mxu0 0.0
  %165 = vmatpush.msra.mxu0 0.0
  %166 = vmatpush.msra.mxu0 0.0
  %167 = vmatpush.msra.mxu0 0.0
  %168 = vmatpush.msra.mxu0 0.0
  %169 = vmatpush.msra.mxu0 %v55
  %170 = vmatpush.msra.mxu0 %v54
  %171 = vmatpush.msra.mxu0 %v53
  %172 = vmatpush.msra.mxu0 %v52
  %173 = vmatmul.f32.gmra.mxu0 %v62
  %v174 = vpop.f32.mrf.mxu0
  %v175 = vadd.f32 %v58, %v174
  %176 = vmatmul.f32.gmra.mxu0 %v65
  %v177 = vpop.f32.mrf.mxu0
  %v178 = vadd.f32 %v58, %v177
  %179 = vmatmul.f32.gmra.mxu0 %v68
  %v180 = vpop.f32.mrf.mxu0
  %v181 = vadd.f32 %v58, %v180
  %182 = vmatmul.f32.gmra.mxu0 %v71
  %v183 = vpop.f32.mrf.mxu0
  %v184 = vadd.f32 %v58, %v183
  %185 = vmatmul.f32.gmra.mxu0 %v74
  %v186 = vpop.f32.mrf.mxu0
  %v187 = vadd.f32 %v58, %v186
  %188 = vmatmul.f32.gmra.mxu0 %v77
  %v189 = vpop.f32.mrf.mxu0
  %v190 = vadd.f32 %v58, %v189
  %191 = vmatmul.f32.gmra.mxu0 %v80
  %v192 = vpop.f32.mrf.mxu0
  %v193 = vadd.f32 %v58, %v192
  %194 = vmatmul.f32.gmra.mxu0 %v83
  %v195 = vpop.f32.mrf.mxu0
  %v196 = vadd.f32 %v58, %v195
  %197 = vmatmul.f32.gmra.mxu0 %v86
  %v198 = vpop.f32.mrf.mxu0
  %v199 = vadd.f32 %v58, %v198
  %200 = vmatmul.f32.gmra.mxu0 %v89
  %v201 = vpop.f32.mrf.mxu0
  %v202 = vadd.f32 %v58, %v201
  %203 = vmatmul.f32.gmra.mxu0 %v92
  %v204 = vpop.f32.mrf.mxu0
  %v205 = vadd.f32 %v58, %v204
  %206 = vmatmul.f32.gmra.mxu0 %v95
  %v207 = vpop.f32.mrf.mxu0
  %v208 = vadd.f32 %v58, %v207
  %209 = vmatmul.f32.gmra.mxu0 %v98
  %v210 = vpop.f32.mrf.mxu0
  %v211 = vadd.f32 %v58, %v210
  %212 = vmatmul.f32.gmra.mxu0 %v101
  %v213 = vpop.f32.mrf.mxu0
  %v214 = vadd.f32 %v58, %v213
  %215 = vmatmul.f32.gmra.mxu0 %v104
  %v216 = vpop.f32.mrf.mxu0
  %v217 = vadd.f32 %v58, %v216
  %218 = vmatmul.f32.gmra.mxu0 %v107
  %v219 = vpop.f32.mrf.mxu0
  %v220 = vadd.f32 %v58, %v219
  %221 = vmatmul.f32.gmra.mxu0 %v110
  %v222 = vpop.f32.mrf.mxu0
  %v223 = vadd.f32 %v58, %v222
  %224 = vmatmul.f32.gmra.mxu0 %v113
  %v225 = vpop.f32.mrf.mxu0
  %v226 = vadd.f32 %v58, %v225
  %227 = vmatmul.f32.gmra.mxu0 %v116
  %v228 = vpop.f32.mrf.mxu0
  %v229 = vadd.f32 %v58, %v228
  %230 = vmatmul.f32.gmra.mxu0 %v119
  %v231 = vpop.f32.mrf.mxu0
  %v232 = vadd.f32 %v58, %v231
  %233 = vmatmul.f32.gmra.mxu0 %v122
  %v234 = vpop.f32.mrf.mxu0
  %v235 = vadd.f32 %v58, %v234
  %236 = vmatmul.f32.gmra.mxu0 %v125
  %v237 = vpop.f32.mrf.mxu0
  %v238 = vadd.f32 %v58, %v237
  %239 = vmatmul.f32.gmra.mxu0 %v128
  %v240 = vpop.f32.mrf.mxu0
  %v241 = vadd.f32 %v58, %v240
  %242 = vmatmul.f32.gmra.mxu0 %v131
  %v243 = vpop.f32.mrf.mxu0
  %v244 = vadd.f32 %v58, %v243
  %245 = vmatmul.f32.gmra.mxu0 %v134
  %v246 = vpop.f32.mrf.mxu0
  %v247 = vadd.f32 %v58, %v246
  %248 = vmatmul.f32.gmra.mxu0 %v137
  %v249 = vpop.f32.mrf.mxu0
  %v250 = vadd.f32 %v58, %v249
  %251 = vmatmul.f32.gmra.mxu0 %v140
  %v252 = vpop.f32.mrf.mxu0
  %v253 = vadd.f32 %v58, %v252
  %254 = vmatmul.f32.gmra.mxu0 %v143
  %v255 = vpop.f32.mrf.mxu0
  %v256 = vadd.f32 %v58, %v255
  %257 = vmatmul.f32.gmra.mxu0 %v146
  %v258 = vpop.f32.mrf.mxu0
  %v259 = vadd.f32 %v58, %v258
  %260 = vmatmul.f32.gmra.mxu0 %v149
  %v261 = vpop.f32.mrf.mxu0
  %v262 = vadd.f32 %v58, %v261
  %263 = vmatmul.f32.gmra.mxu0 %v152
  %v264 = vpop.f32.mrf.mxu0
  %v265 = vadd.f32 %v58, %v264
  %266 = vmatmul.f32.gmra.mxu0 %v155
  %v267 = vpop.f32.mrf.mxu0
  %v268 = vadd.f32 %v58, %v267
  %269 = vdwg.mxu0
  %v270 = vmax.f32 %v175, 0.0
  %v271 = vmax.f32 %v178, 0.0
  %v272 = vmax.f32 %v181, 0.0
  %v273 = vmax.f32 %v184, 0.0
  %v274 = vmax.f32 %v187, 0.0
  %v275 = vmax.f32 %v190, 0.0
  %v276 = vmax.f32 %v193, 0.0
  %v277 = vmax.f32 %v196, 0.0
  %v278 = vmax.f32 %v199, 0.0
  %v279 = vmax.f32 %v202, 0.0
  %v280 = vmax.f32 %v205, 0.0
  %v281 = vmax.f32 %v208, 0.0
  %v282 = vmax.f32 %v211, 0.0
  %v283 = vmax.f32 %v214, 0.0
  %v284 = vmax.f32 %v217, 0.0
  %v285 = vmax.f32 %v220, 0.0
  %v286 = vmax.f32 %v223, 0.0
  %v287 = vmax.f32 %v226, 0.0
  %v288 = vmax.f32 %v229, 0.0
  %v289 = vmax.f32 %v232, 0.0
  %v290 = vmax.f32 %v235, 0.0
  %v291 = vmax.f32 %v238, 0.0
  %v292 = vmax.f32 %v241, 0.0
  %v293 = vmax.f32 %v244, 0.0
  %v294 = vmax.f32 %v247, 0.0
  %v295 = vmax.f32 %v250, 0.0
  %v296 = vmax.f32 %v253, 0.0
  %v297 = vmax.f32 %v256, 0.0
  %v298 = vmax.f32 %v259, 0.0
  %v299 = vmax.f32 %v262, 0.0
  %v300 = vmax.f32 %v265, 0.0
  %v301 = vmax.f32 %v268, 0.0
  %v302 = vld [vmem:[%s3] sm:$0xff]
  %v303 = vld [vmem:[%s3 + $0x8] sm:$0xff]
  %v304 = vld [vmem:[%s3 + $0x10] sm:$0xff]
  %v305 = vld [vmem:[%s3 + $0x18] sm:$0xff]
  %v306 = vld [vmem:[%s3 + $0x20] sm:$0xff]
  %v307 = vld [vmem:[%s3 + $0x28] sm:$0xff]
  %v308 = vld [vmem:[%s3 + $0x30] sm:$0xff]
  %v309 = vld [vmem:[%s3 + $0x38] sm:$0xff]
  %v310 = vld [vmem:[%s4] sm:$0x1]
  %v312 = vperm.slane %v310, 0
  %vm314 = vcmask 523264
  %v316 = vsel %vm314, %v270, 0
  %v319 = vsel %vm314, %v271, 0
  %v322 = vsel %vm314, %v272, 0
  %v325 = vsel %vm314, %v273, 0
  %v328 = vsel %vm314, %v274, 0
  %v331 = vsel %vm314, %v275, 0
  %v334 = vsel %vm314, %v276, 0
  %v337 = vsel %vm314, %v277, 0
  %v340 = vsel %vm314, %v278, 0
  %v343 = vsel %vm314, %v279, 0
  %v346 = vsel %vm314, %v280, 0
  %v349 = vsel %vm314, %v281, 0
  %v352 = vsel %vm314, %v282, 0
  %v355 = vsel %vm314, %v283, 0
  %v358 = vsel %vm314, %v284, 0
  %v361 = vsel %vm314, %v285, 0
  %v364 = vsel %vm314, %v286, 0
  %v367 = vsel %vm314, %v287, 0
  %v370 = vsel %vm314, %v288, 0
  %v373 = vsel %vm314, %v289, 0
  %v376 = vsel %vm314, %v290, 0
  %v379 = vsel %vm314, %v291, 0
  %v382 = vsel %vm314, %v292, 0
  %v385 = vsel %vm314, %v293, 0
  %v388 = vsel %vm314, %v294, 0
  %v391 = vsel %vm314, %v295, 0
  %v394 = vsel %vm314, %v296, 0
  %v397 = vsel %vm314, %v297, 0
  %v400 = vsel %vm314, %v298, 0
  %v403 = vsel %vm314, %v299, 0
  %v406 = vsel %vm314, %v300, 0
  %v409 = vsel %vm314, %v301, 0
  %411 = vmatpush.msra.mxu0 0.0
  %412 = vmatpush.msra.mxu0 0.0
  %413 = vmatpush.msra.mxu0 0.0
  %414 = vmatpush.msra.mxu0 0.0
  %415 = vmatpush.msra.mxu0 0.0
  %416 = vmatpush.msra.mxu0 0.0
  %417 = vmatpush.msra.mxu0 0.0
  %418 = vmatpush.msra.mxu0 0.0
  %419 = vmatpush.msra.mxu0 %v309
  %420 = vmatpush.msra.mxu0 %v308
  %421 = vmatpush.msra.mxu0 %v307
  %422 = vmatpush.msra.mxu0 %v306
  %423 = vmatpush.msra.mxu0 %v305
  %424 = vmatpush.msra.mxu0 %v304
  %425 = vmatpush.msra.mxu0 %v303
  %426 = vmatpush.msra.mxu0 %v302
  %427 = vmatmul.f32.gmra.mxu0 %v316
  %v428 = vpop.f32.mrf.mxu0
  %v429 = vadd.f32 %v312, %v428
  %430 = vmatmul.f32.gmra.mxu0 %v319
  %v431 = vpop.f32.mrf.mxu0
  %v432 = vadd.f32 %v312, %v431
  %433 = vmatmul.f32.gmra.mxu0 %v322
  %v434 = vpop.f32.mrf.mxu0
  %v435 = vadd.f32 %v312, %v434
  %436 = vmatmul.f32.gmra.mxu0 %v325
  %v437 = vpop.f32.mrf.mxu0
  %v438 = vadd.f32 %v312, %v437
  %439 = vmatmul.f32.gmra.mxu0 %v328
  %v440 = vpop.f32.mrf.mxu0
  %v441 = vadd.f32 %v312, %v440
  %442 = vmatmul.f32.gmra.mxu0 %v331
  %v443 = vpop.f32.mrf.mxu0
  %v444 = vadd.f32 %v312, %v443
  %445 = vmatmul.f32.gmra.mxu0 %v334
  %v446 = vpop.f32.mrf.mxu0
  %v447 = vadd.f32 %v312, %v446
  %448 = vmatmul.f32.gmra.mxu0 %v337
  %v449 = vpop.f32.mrf.mxu0
  %v450 = vadd.f32 %v312, %v449
  %451 = vmatmul.f32.gmra.mxu0 %v340
  %v452 = vpop.f32.mrf.mxu0
  %v453 = vadd.f32 %v312, %v452
  %454 = vmatmul.f32.gmra.mxu0 %v343
  %v455 = vpop.f32.mrf.mxu0
  %v456 = vadd.f32 %v312, %v455
  %457 = vmatmul.f32.gmra.mxu0 %v346
  %v458 = vpop.f32.mrf.mxu0
  %v459 = vadd.f32 %v312, %v458
  %460 = vmatmul.f32.gmra.mxu0 %v349
  %v461 = vpop.f32.mrf.mxu0
  %v462 = vadd.f32 %v312, %v461
  %463 = vmatmul.f32.gmra.mxu0 %v352
  %v464 = vpop.f32.mrf.mxu0
  %v465 = vadd.f32 %v312, %v464
  %466 = vmatmul.f32.gmra.mxu0 %v355
  %v467 = vpop.f32.mrf.mxu0
  %v468 = vadd.f32 %v312, %v467
  %469 = vmatmul.f32.gmra.mxu0 %v358
  %v470 = vpop.f32.mrf.mxu0
  %v471 = vadd.f32 %v312, %v470
  %472 = vmatmul.f32.gmra.mxu0 %v361
  %v473 = vpop.f32.mrf.mxu0
  %v474 = vadd.f32 %v312, %v473
  %475 = vmatmul.f32.gmra.mxu0 %v364
  %v476 = vpop.f32.mrf.mxu0
  %v477 = vadd.f32 %v312, %v476
  %478 = vmatmul.f32.gmra.mxu0 %v367
  %v479 = vpop.f32.mrf.mxu0
  %v480 = vadd.f32 %v312, %v479
  %481 = vmatmul.f32.gmra.mxu0 %v370
  %v482 = vpop.f32.mrf.mxu0
  %v483 = vadd.f32 %v312, %v482
  %484 = vmatmul.f32.gmra.mxu0 %v373
  %v485 = vpop.f32.mrf.mxu0
  %v486 = vadd.f32 %v312, %v485
  %487 = vmatmul.f32.gmra.mxu0 %v376
  %v488 = vpop.f32.mrf.mxu0
  %v489 = vadd.f32 %v312, %v488
  %490 = vmatmul.f32.gmra.mxu0 %v379
  %v491 = vpop.f32.mrf.mxu0
  %v492 = vadd.f32 %v312, %v491
  %493 = vmatmul.f32.gmra.mxu0 %v382
  %v494 = vpop.f32.mrf.mxu0
  %v495 = vadd.f32 %v312, %v494
  %496 = vmatmul.f32.gmra.mxu0 %v385
  %v497 = vpop.f32.mrf.mxu0
  %v498 = vadd.f32 %v312, %v497
  %499 = vmatmul.f32.gmra.mxu0 %v388
  %v500 = vpop.f32.mrf.mxu0
  %v501 = vadd.f32 %v312, %v500
  %502 = vmatmul.f32.gmra.mxu0 %v391
  %v503 = vpop.f32.mrf.mxu0
  %v504 = vadd.f32 %v312, %v503
  %505 = vmatmul.f32.gmra.mxu0 %v394
  %v506 = vpop.f32.mrf.mxu0
  %v507 = vadd.f32 %v312, %v506
  %508 = vmatmul.f32.gmra.mxu0 %v397
  %v509 = vpop.f32.mrf.mxu0
  %v510 = vadd.f32 %v312, %v509
  %511 = vmatmul.f32.gmra.mxu0 %v400
  %v512 = vpop.f32.mrf.mxu0
  %v513 = vadd.f32 %v312, %v512
  %514 = vmatmul.f32.gmra.mxu0 %v403
  %v515 = vpop.f32.mrf.mxu0
  %v516 = vadd.f32 %v312, %v515
  %517 = vmatmul.f32.gmra.mxu0 %v406
  %v518 = vpop.f32.mrf.mxu0
  %v519 = vadd.f32 %v312, %v518
  %520 = vmatmul.f32.gmra.mxu0 %v409
  %v521 = vpop.f32.mrf.mxu0
  %v522 = vadd.f32 %v312, %v521
  %523 = vdwg.mxu0
  %vm524 = vcmask 64512
  %525 = vst.msk [vmem:[%s5] sm:$0xff] %vm524, %v429
  %526 = vst.msk [vmem:[%s5 + $0x8] sm:$0xff] %vm524, %v432
  %527 = vst.msk [vmem:[%s5 + $0x10] sm:$0xff] %vm524, %v435
  %528 = vst.msk [vmem:[%s5 + $0x18] sm:$0xff] %vm524, %v438
  %529 = vst.msk [vmem:[%s5 + $0x20] sm:$0xff] %vm524, %v441
  %530 = vst.msk [vmem:[%s5 + $0x28] sm:$0xff] %vm524, %v444
  %531 = vst.msk [vmem:[%s5 + $0x30] sm:$0xff] %vm524, %v447
  %532 = vst.msk [vmem:[%s5 + $0x38] sm:$0xff] %vm524, %v450
  %533 = vst.msk [vmem:[%s5 + $0x40] sm:$0xff] %vm524, %v453
  %534 = vst.msk [vmem:[%s5 + $0x48] sm:$0xff] %vm524, %v456
  %535 = vst.msk [vmem:[%s5 + $0x50] sm:$0xff] %vm524, %v459
  %536 = vst.msk [vmem:[%s5 + $0x58] sm:$0xff] %vm524, %v462
  %537 = vst.msk [vmem:[%s5 + $0x60] sm:$0xff] %vm524, %v465
  %538 = vst.msk [vmem:[%s5 + $0x68] sm:$0xff] %vm524, %v468
  %539 = vst.msk [vmem:[%s5 + $0x70] sm:$0xff] %vm524, %v471
  %540 = vst.msk [vmem:[%s5 + $0x78] sm:$0xff] %vm524, %v474
  %541 = vst.msk [vmem:[%s5 + $0x80] sm:$0xff] %vm524, %v477
  %542 = vst.msk [vmem:[%s5 + $0x88] sm:$0xff] %vm524, %v480
  %543 = vst.msk [vmem:[%s5 + $0x90] sm:$0xff] %vm524, %v483
  %544 = vst.msk [vmem:[%s5 + $0x98] sm:$0xff] %vm524, %v486
  %545 = vst.msk [vmem:[%s5 + $0xa0] sm:$0xff] %vm524, %v489
  %546 = vst.msk [vmem:[%s5 + $0xa8] sm:$0xff] %vm524, %v492
  %547 = vst.msk [vmem:[%s5 + $0xb0] sm:$0xff] %vm524, %v495
  %548 = vst.msk [vmem:[%s5 + $0xb8] sm:$0xff] %vm524, %v498
  %549 = vst.msk [vmem:[%s5 + $0xc0] sm:$0xff] %vm524, %v501
  %550 = vst.msk [vmem:[%s5 + $0xc8] sm:$0xff] %vm524, %v504
  %551 = vst.msk [vmem:[%s5 + $0xd0] sm:$0xff] %vm524, %v507
  %552 = vst.msk [vmem:[%s5 + $0xd8] sm:$0xff] %vm524, %v510
  %553 = vst.msk [vmem:[%s5 + $0xe0] sm:$0xff] %vm524, %v513
  %554 = vst.msk [vmem:[%s5 + $0xe8] sm:$0xff] %vm524, %v516
  %555 = vst.msk [vmem:[%s5 + $0xf0] sm:$0xff] %vm524, %v519
  %556 = vst.msk [vmem:[%s5 + $0xf8] sm:$0xff] %vm524, %v522
  // Predicated region
  $region22: #{policy_network_forward.1} parent=0 // pred_check
    _
  $region23: #{policy_network_forward.1} parent=0 // pred_check_branch
    %558 = sbr.rel (0) target = $region25
  $region24: #{policy_network_forward.1} parent=0 // pred_region
    _
  $region25: #{policy_network_forward.1} parent=0 // pred_fallthru
    _
  // Predicated region
  $region26: #{policy_network_forward.1} parent=0 // pred_check
    _
  $region27: #{policy_network_forward.1} parent=0 // pred_check_branch
    %560 = sbr.rel (0) target = $region29
  $region28: #{policy_network_forward.1} parent=0 // pred_region
    _
  $region29: #{policy_network_forward.1} parent=0 // pred_fallthru
    _

</llo_original>
